<compile_context>
chip_gen: v7x
topology: tpu7x:2x2x1
jax: 0.10.0
libtpu: 0.0.40
codegen_flags: <defaults>
</compile_context>

<pallas_src>
import jax
import jax.numpy as jnp
from jax.experimental import pallas as pl
from jax.experimental.pallas import tpu as pltpu


def _conv3_relu_kernel(p_ref, w_ref, b_ref, o_ref):
    # p_ref: [N, K, Ppad] f32   (im2col patches, zero-padded to lane-dense Ppad)
    # w_ref: [cout, K]    f32   (flattened conv weights, resident in VMEM)
    # b_ref: [cout, 1]    f32
    # o_ref: [N, cout, Ppad]    (input dtype)
    w = w_ref[...]
    b = b_ref[...]
    # N is tiny and static -> unrolled MXU pushes; one K=ks*ks*cin contraction per image
    # instead of 9 tiny per-tap matmuls.
    for i in range(p_ref.shape[0]):
        acc = jnp.dot(w, p_ref[i], preferred_element_type=jnp.float32)   # [cout, Ppad]
        o_ref[i] = jnp.maximum(acc + b, 0.0).astype(o_ref.dtype)         # bias+ReLU in f32


def prep_conv_params(weight_hwio, bias):
    """One-time parameter prep (hoisted out of the per-call forward path)."""
    ks, _, cin, cout = weight_hwio.shape
    k = ks * ks * cin
    w2 = weight_hwio.reshape(k, cout).T.astype(jnp.float32)    # [cout, K], row order (kh, kw, c)
    b2 = bias.reshape(cout, 1).astype(jnp.float32)             # [cout, 1]
    return w2, b2


def cnn3_relu_block(x_nchw, w2, b2, *, ks=3, padding=0):
    """Forward pass of Cnn3ReluBlock (inference). x_nchw: [N,Cin,H,W] -> [N,Cout,Ho,Wo]."""
    n, cin, h, w = x_nchw.shape
    cout, k = w2.shape

    if padding:
        x_nchw = jnp.pad(
            x_nchw, ((0, 0), (0, 0), (padding, padding), (padding, padding)))
        h, w = h + 2 * padding, w + 2 * padding

    ho, wo = h - ks + 1, w - ks + 1
    p = ho * wo
    p_pad = ((p + 127) // 128) * 128       # lane-dense: unmasked vst on the output

    # im2col: K index ordered (kh, kw, c) to match w2.  With allow_input_fusion this
    # whole producer (slices -> stack -> reshape -> pad) fuses into the pallas_call
    # input instead of running as its own XLA kernel with an HBM round trip.
    taps = [x_nchw[:, :, kh:kh + ho, kw:kw + wo]
            for kh in range(ks) for kw in range(ks)]            # each [N, Cin, Ho, Wo]
    patches = jnp.stack(taps, axis=1).reshape(n, k, p)          # [N, K, Ho*Wo]
    patches = jnp.pad(patches, ((0, 0), (0, 0), (0, p_pad - p)))

    out = pl.pallas_call(
        _conv3_relu_kernel,
        out_shape=jax.ShapeDtypeStruct((n, cout, p_pad), x_nchw.dtype),
        compiler_params=pltpu.CompilerParams(
            # Allow XLA to fuse the im2col producer of input 0 (patches) into the call.
            allow_input_fusion=[True, False, False],
        ),
    )(patches, w2, b2)

    # Dropout2d(p=0.5): identity in eval mode.
    # Strip the lane padding and reshape back to NCHW.
    return out[:, :, :p].reshape(n, cout, ho, wo)


if __name__ == "__main__":
    # Small shapes consistent with the module: batch=2, Cin=4, Cout=8, 16x16 spatial, ks=3.
    N, CIN, COUT, H, W, KS = 2, 4, 8, 16, 16, 3

    key = jax.random.PRNGKey(0)
    kx, kw_, kb = jax.random.split(key, 3)

    x = jax.random.normal(kx, (N, CIN, H, W), dtype=jnp.float32)
    bound = 1.0 / (CIN * KS * KS) ** 0.5
    weight_hwio = jax.random.uniform(
        kw_, (KS, KS, CIN, COUT), minval=-bound, maxval=bound, dtype=jnp.float32)
    bias = jax.random.uniform(
        kb, (COUT,), minval=-bound, maxval=bound, dtype=jnp.float32)

    # Parameter prep happens once, outside the per-call (jitted) forward path.
    w2, b2 = prep_conv_params(weight_hwio, bias)

    fwd = jax.jit(cnn3_relu_block, static_argnames=("ks", "padding"))
    out = jax.block_until_ready(fwd(x, w2, b2, ks=KS, padding=0))

    # Reference: true f32 conv (precision=HIGHEST) + bias + ReLU.  Tolerance leaves room
    # for the MXU's bf16-pass decomposition of f32 matmuls; structural errors (wrong tap
    # order / bias / missing ReLU) would be O(1), far above this bound.
    ref = jax.lax.conv_general_dilated(
        x, weight_hwio, window_strides=(1, 1), padding="VALID",
        dimension_numbers=("NCHW", "HWIO", "NCHW"),
        precision=jax.lax.Precision.HIGHEST,
    ) + bias.reshape(1, COUT, 1, 1)
    ref = jnp.maximum(ref, 0.0)

    assert out.shape == (N, COUT, H - KS + 1, W - KS + 1), out.shape
    assert out.dtype == x.dtype, out.dtype
    err = float(jnp.max(jnp.abs(out - ref)))
    assert jnp.allclose(out, ref, atol=1e-2, rtol=1e-2), err

    print("KERNEL_OK")
</pallas_src>

<mosaic_0001>
module attributes {stable_mosaic.version = 11 : i64} {
  func.func @_conv3_relu_kernel(%arg0: memref<2x36x256xf32, #tpu.memory_space<vmem>>, %arg1: memref<8x36xf32, #tpu.memory_space<vmem>>, %arg2: memref<8x1xf32, #tpu.memory_space<vmem>>, %arg3: memref<2x8x256xf32, #tpu.memory_space<vmem>>) attributes {dimension_semantics = [], scalar_prefetch = 0 : i64, scratch_operands = 0 : i64, tpu.core_type = #tpu.core_type<tc>} {
    %c0 = arith.constant 0 : index
    %c0_0 = arith.constant 0 : index
    %0 = vector.load %arg1[%c0, %c0_0] : memref<8x36xf32, #tpu.memory_space<vmem>>, vector<8x36xf32>
    %c0_1 = arith.constant 0 : index
    %c0_2 = arith.constant 0 : index
    %1 = vector.load %arg2[%c0_1, %c0_2] : memref<8x1xf32, #tpu.memory_space<vmem>>, vector<8x1xf32>
    %c0_3 = arith.constant 0 : index
    %c0_4 = arith.constant 0 : index
    %c0_5 = arith.constant 0 : index
    %2 = vector.load %arg0[%c0_3, %c0_4, %c0_5] : memref<2x36x256xf32, #tpu.memory_space<vmem>>, vector<1x36x256xf32>
    %3 = vector.shape_cast %2 : vector<1x36x256xf32> to vector<36x256xf32>
    %cst = arith.constant dense<0.000000e+00> : vector<8x256xf32>
    %4 = tpu.matmul %0, %3, %cst {dimension_numbers = #tpu.dot_dimension_numbers<[1], [0], [0], [1], [0, 0, 1, 1], [], []>} : vector<8x36xf32>, vector<36x256xf32>, vector<8x256xf32> -> vector<8x256xf32>
    %5 = vector.broadcast %1 : vector<8x1xf32> to vector<8x256xf32>
    %6 = arith.addf %4, %5 : vector<8x256xf32>
    %cst_6 = arith.constant 0.000000e+00 : f32
    %7 = vector.broadcast %cst_6 : f32 to vector<8x256xf32>
    %8 = arith.maximumf %6, %7 : vector<8x256xf32>
    %c0_7 = arith.constant 0 : index
    %c0_8 = arith.constant 0 : index
    %c0_9 = arith.constant 0 : index
    %9 = vector.load %arg3[%c0_7, %c0_8, %c0_9] : memref<2x8x256xf32, #tpu.memory_space<vmem>>, vector<1x8x256xf32>
    %10 = vector.shape_cast %9 : vector<1x8x256xf32> to vector<8x256xf32>
    %11 = vector.shape_cast %8 : vector<8x256xf32> to vector<1x8x256xf32>
    tpu.vector_store %arg3[%c0_7, %c0_8, %c0_9], %11 {strides = array<i32>} : memref<2x8x256xf32, #tpu.memory_space<vmem>>, vector<1x8x256xf32>,
    %c1 = arith.constant 1 : index
    %c0_10 = arith.constant 0 : index
    %c0_11 = arith.constant 0 : index
    %12 = vector.load %arg0[%c1, %c0_10, %c0_11] : memref<2x36x256xf32, #tpu.memory_space<vmem>>, vector<1x36x256xf32>
    %13 = vector.shape_cast %12 : vector<1x36x256xf32> to vector<36x256xf32>
    %cst_12 = arith.constant dense<0.000000e+00> : vector<8x256xf32>
    %14 = tpu.matmul %0, %13, %cst_12 {dimension_numbers = #tpu.dot_dimension_numbers<[1], [0], [0], [1], [0, 0, 1, 1], [], []>} : vector<8x36xf32>, vector<36x256xf32>, vector<8x256xf32> -> vector<8x256xf32>
    %15 = vector.broadcast %1 : vector<8x1xf32> to vector<8x256xf32>
    %16 = arith.addf %14, %15 : vector<8x256xf32>
    %cst_13 = arith.constant 0.000000e+00 : f32
    %17 = vector.broadcast %cst_13 : f32 to vector<8x256xf32>
    %18 = arith.maximumf %16, %17 : vector<8x256xf32>
    %c1_14 = arith.constant 1 : index
    %c0_15 = arith.constant 0 : index
    %c0_16 = arith.constant 0 : index
    %19 = vector.load %arg3[%c1_14, %c0_15, %c0_16] : memref<2x8x256xf32, #tpu.memory_space<vmem>>, vector<1x8x256xf32>
    %20 = vector.shape_cast %19 : vector<1x8x256xf32> to vector<8x256xf32>
    %21 = vector.shape_cast %18 : vector<8x256xf32> to vector<1x8x256xf32>
    tpu.vector_store %arg3[%c1_14, %c0_15, %c0_16], %21 {strides = array<i32>} : memref<2x8x256xf32, #tpu.memory_space<vmem>>, vector<1x8x256xf32>,
    return
  }
}

</mosaic_0001>

<llo_original>
// kernel: cnn3_relu_block.2
$region0: #{cnn3_relu_block.2}
  #allocation0 [shape = 'u32[]', space=smem, size = 0x4, offset = 0x4, fixed_abs, tag = 'smem constant byte address 0x4 - core index']
  #allocation1 [shape = 'u32[144,128]{1,0:T(1,128)}', space=vmem, size = 0x12000, scoped, tag = 'internal scratch']
  #allocation2 [shape = 'u32[2048]{0}', space=vmem, size = 0x2000, scoped, tag = 'scoped memory for cnn3_relu_block.2']
  #allocation3 [shape = 'u32[2048]{0}', space=vmem, size = 0x2000, scoped, tag = 'scoped memory for cnn3_relu_block.2']
  #allocation4 [shape = 'u32[2048]{0}', space=vmem, size = 0x2000, scoped, tag = 'scoped memory for cnn3_relu_block.2']
  #allocation5 [shape = 'u32[2048]{0}', space=vmem, size = 0x2000, scoped, tag = 'scoped memory for cnn3_relu_block.2']
  #allocation6 [shape = 'u32[2048]{0}', space=vmem, size = 0x2000, scoped, tag = 'scoped memory for cnn3_relu_block.2']
  %s0 = inlined_call_operand.vmem [shape: f32[8,36], index: 0, kind: input, shape index: {}]
  %s1 = inlined_call_operand.vmem [shape: f32[8,1], index: 1, kind: input, shape index: {}]
  %s2 = inlined_call_operand.vmem [shape: f32[2,36,196], index: 2, kind: input, shape index: {}]
  %s3 = inlined_call_operand.<no memory space> [shape: f32[], index: 3, kind: input, shape index: {}]
  %s4 = inlined_call_operand.vmem [shape: f32[2,8,256], index: 4, kind: output, shape index: {}]
  %s5 = sld [smem:[#allocation0]]
  $region22: #{cnn3_relu_block.2} parent=0
    _
  %s7 = ssub.s32 1, %s5
  %s8 = scalar_select 0, %s7, %s5
  %v9 = vstv %s3
  $region1: #{cnn3_relu_block.2} parent=0
    #allocation7 [shape = 'u8[81920]{0}', space=vmem, size = 0x14000, dematerialized = true, scoped, tag = 'FusionAdapter Buffer %fusion.1 = f32[2,36,256]{2,1,0:T(8,128)} fusion(%param_2.1, %param_3), kind=kLoop, calls=%fused_computation.1.clone, metadata={op_name="jit(cnn3_relu_block)/jit(_pad)/pad" stack_frame_id=9}']
    // Predicated region
    $region2: #{cnn3_relu_block.2} parent=1 // pred_check
      _
    $region3: #{cnn3_relu_block.2} parent=1 // pred_check_branch
      %11 = sbr.rel (0) target = $region5
    $region4: #{cnn3_relu_block.2} parent=1 // pred_region
      _
    $region5: #{cnn3_relu_block.2} parent=1 // pred_fallthru
      _
    // Predicated region
    $region6: #{cnn3_relu_block.2} parent=1 // pred_check
      _
    $region7: #{cnn3_relu_block.2} parent=1 // pred_check_branch
      %13 = sbr.rel (0) target = $region9
    $region8: #{cnn3_relu_block.2} parent=1 // pred_region
      _
    $region9: #{cnn3_relu_block.2} parent=1 // pred_fallthru
      _
    // Predicated region
    $region10: #{cnn3_relu_block.2} parent=1 // pred_check
      _
    $region11: #{cnn3_relu_block.2} parent=1 // pred_check_branch
      %15 = sbr.rel (0) target = $region13
    $region12: #{cnn3_relu_block.2} parent=1 // pred_region
      _
    $region13: #{cnn3_relu_block.2} parent=1 // pred_fallthru
      _
    %v16 = vld [vmem:[%s2] sm:$0xff]
    %v17 = vlaneseq
    %v18 = vshrl.u32 %v17, 7
    %vm20 = vcmp.lt.s32.totalorder %v18, 36
    %v21 = vsel %vm20, %v16, %v9
    %v22 = vlaneseq
    %v23 = vand.u32 %v22, 127
    %vm25 = vcmp.lt.s32.totalorder %v23, 196
    %v26 = vsel %vm25, %v21, %v9
    %28 = vst [vmem:[#allocation7] sm:$0xff] %v26
    %s29 = scalar_lea.vmem %s2, 8
    %v30 = vld [vmem:[%s29] sm:$0xff]
    %v31 = vlaneseq
    %v32 = vshrl.u32 %v31, 7
    %vm34 = vcmp.lt.s32.totalorder %v32, 36
    %v35 = vsel %vm34, %v30, %v9
    %v36 = vlaneseq
    %v37 = vand.u32 %v36, 127
    %v38 = vadd.s32 %v37, 128
    %vm39 = vcmp.lt.s32.totalorder %v38, 196
    %v40 = vsel %vm39, %v35, %v9
    %s41 = scalar_lea.vmem [#allocation7], 8
    %43 = vst [vmem:[%s41] sm:$0xff] %v40
    %s44 = scalar_lea.vmem %s2, 16
    %v45 = vld [vmem:[%s44] sm:$0xff]
    %v46 = vlaneseq
    %v47 = vshrl.u32 %v46, 7
    %v48 = vadd.s32 %v47, 8
    %vm49 = vcmp.lt.s32.totalorder %v48, 36
    %v50 = vsel %vm49, %v45, %v9
    %v51 = vlaneseq
    %v52 = vand.u32 %v51, 127
    %vm54 = vcmp.lt.s32.totalorder %v52, 196
    %v55 = vsel %vm54, %v50, %v9
    %s56 = scalar_lea.vmem [#allocation7], 16
    %58 = vst [vmem:[%s56] sm:$0xff] %v55
    %s59 = scalar_lea.vmem %s2, 24
    %v60 = vld [vmem:[%s59] sm:$0xff]
    %v61 = vlaneseq
    %v62 = vshrl.u32 %v61, 7
    %v63 = vadd.s32 %v62, 8
    %vm64 = vcmp.lt.s32.totalorder %v63, 36
    %v65 = vsel %vm64, %v60, %v9
    %v66 = vlaneseq
    %v67 = vand.u32 %v66, 127
    %v68 = vadd.s32 %v67, 128
    %vm69 = vcmp.lt.s32.totalorder %v68, 196
    %v70 = vsel %vm69, %v65, %v9
    %s71 = scalar_lea.vmem [#allocation7], 24
    %73 = vst [vmem:[%s71] sm:$0xff] %v70
    %s74 = scalar_lea.vmem %s2, 32
    %v75 = vld [vmem:[%s74] sm:$0xff]
    %v76 = vlaneseq
    %v77 = vshrl.u32 %v76, 7
    %v78 = vadd.s32 %v77, 16
    %vm79 = vcmp.lt.s32.totalorder %v78, 36
    %v80 = vsel %vm79, %v75, %v9
    %v81 = vlaneseq
    %v82 = vand.u32 %v81, 127
    %vm84 = vcmp.lt.s32.totalorder %v82, 196
    %v85 = vsel %vm84, %v80, %v9
    %s86 = scalar_lea.vmem [#allocation7], 32
    %88 = vst [vmem:[%s86] sm:$0xff] %v85
    %s89 = scalar_lea.vmem %s2, 40
    %v90 = vld [vmem:[%s89] sm:$0xff]
    %v91 = vlaneseq
    %v92 = vshrl.u32 %v91, 7
    %v93 = vadd.s32 %v92, 16
    %vm94 = vcmp.lt.s32.totalorder %v93, 36
    %v95 = vsel %vm94, %v90, %v9
    %v96 = vlaneseq
    %v97 = vand.u32 %v96, 127
    %v98 = vadd.s32 %v97, 128
    %vm99 = vcmp.lt.s32.totalorder %v98, 196
    %v100 = vsel %vm99, %v95, %v9
    %s101 = scalar_lea.vmem [#allocation7], 40
    %103 = vst [vmem:[%s101] sm:$0xff] %v100
    %s104 = scalar_lea.vmem %s2, 48
    %v105 = vld [vmem:[%s104] sm:$0xff]
    %v106 = vlaneseq
    %v107 = vshrl.u32 %v106, 7
    %v108 = vadd.s32 %v107, 24
    %vm109 = vcmp.lt.s32.totalorder %v108, 36
    %v110 = vsel %vm109, %v105, %v9
    %v111 = vlaneseq
    %v112 = vand.u32 %v111, 127
    %vm114 = vcmp.lt.s32.totalorder %v112, 196
    %v115 = vsel %vm114, %v110, %v9
    %s116 = scalar_lea.vmem [#allocation7], 48
    %118 = vst [vmem:[%s116] sm:$0xff] %v115
    %s119 = scalar_lea.vmem %s2, 56
    %v120 = vld [vmem:[%s119] sm:$0xff]
    %v121 = vlaneseq
    %v122 = vshrl.u32 %v121, 7
    %v123 = vadd.s32 %v122, 24
    %vm124 = vcmp.lt.s32.totalorder %v123, 36
    %v125 = vsel %vm124, %v120, %v9
    %v126 = vlaneseq
    %v127 = vand.u32 %v126, 127
    %v128 = vadd.s32 %v127, 128
    %vm129 = vcmp.lt.s32.totalorder %v128, 196
    %v130 = vsel %vm129, %v125, %v9
    %s131 = scalar_lea.vmem [#allocation7], 56
    %133 = vst [vmem:[%s131] sm:$0xff] %v130
    %s134 = scalar_lea.vmem %s2, 64
    %v135 = vld [vmem:[%s134] sm:$0xff]
    %v136 = vlaneseq
    %v137 = vshrl.u32 %v136, 7
    %v138 = vadd.s32 %v137, 32
    %vm139 = vcmp.lt.s32.totalorder %v138, 36
    %v140 = vsel %vm139, %v135, %v9
    %v141 = vlaneseq
    %v142 = vand.u32 %v141, 127
    %vm144 = vcmp.lt.s32.totalorder %v142, 196
    %v145 = vsel %vm144, %v140, %v9
    %s146 = scalar_lea.vmem [#allocation7], 64
    %148 = vst [vmem:[%s146] sm:$0xff] %v145
    %s149 = scalar_lea.vmem %s2, 72
    %v150 = vld [vmem:[%s149] sm:$0xff]
    %v151 = vlaneseq
    %v152 = vshrl.u32 %v151, 7
    %v153 = vadd.s32 %v152, 32
    %vm154 = vcmp.lt.s32.totalorder %v153, 36
    %v155 = vsel %vm154, %v150, %v9
    %v156 = vlaneseq
    %v157 = vand.u32 %v156, 127
    %v158 = vadd.s32 %v157, 128
    %vm159 = vcmp.lt.s32.totalorder %v158, 196
    %v160 = vsel %vm159, %v155, %v9
    %s161 = scalar_lea.vmem [#allocation7], 72
    %163 = vst [vmem:[%s161] sm:$0xff] %v160
    %s164 = scalar_lea.vmem %s2, 80
    %v165 = vld [vmem:[%s164] sm:$0xff]
    %v166 = vlaneseq
    %v167 = vshrl.u32 %v166, 7
    %vm169 = vcmp.lt.s32.totalorder %v167, 36
    %v170 = vsel %vm169, %v165, %v9
    %v171 = vlaneseq
    %v172 = vand.u32 %v171, 127
    %vm174 = vcmp.lt.s32.totalorder %v172, 196
    %v175 = vsel %vm174, %v170, %v9
    %s176 = scalar_lea.vmem [#allocation7], 80
    %178 = vst [vmem:[%s176] sm:$0xff] %v175
    %s179 = scalar_lea.vmem %s2, 88
    %v180 = vld [vmem:[%s179] sm:$0xff]
    %v181 = vlaneseq
    %v182 = vshrl.u32 %v181, 7
    %vm184 = vcmp.lt.s32.totalorder %v182, 36
    %v185 = vsel %vm184, %v180, %v9
    %v186 = vlaneseq
    %v187 = vand.u32 %v186, 127
    %v188 = vadd.s32 %v187, 128
    %vm189 = vcmp.lt.s32.totalorder %v188, 196
    %v190 = vsel %vm189, %v185, %v9
    %s191 = scalar_lea.vmem [#allocation7], 88
    %193 = vst [vmem:[%s191] sm:$0xff] %v190
    %s194 = scalar_lea.vmem %s2, 96
    %v195 = vld [vmem:[%s194] sm:$0xff]
    %v196 = vlaneseq
    %v197 = vshrl.u32 %v196, 7
    %v198 = vadd.s32 %v197, 8
    %vm199 = vcmp.lt.s32.totalorder %v198, 36
    %v200 = vsel %vm199, %v195, %v9
    %v201 = vlaneseq
    %v202 = vand.u32 %v201, 127
    %vm204 = vcmp.lt.s32.totalorder %v202, 196
    %v205 = vsel %vm204, %v200, %v9
    %s206 = scalar_lea.vmem [#allocation7], 96
    %208 = vst [vmem:[%s206] sm:$0xff] %v205
    %s209 = scalar_lea.vmem %s2, 104
    %v210 = vld [vmem:[%s209] sm:$0xff]
    %v211 = vlaneseq
    %v212 = vshrl.u32 %v211, 7
    %v213 = vadd.s32 %v212, 8
    %vm214 = vcmp.lt.s32.totalorder %v213, 36
    %v215 = vsel %vm214, %v210, %v9
    %v216 = vlaneseq
    %v217 = vand.u32 %v216, 127
    %v218 = vadd.s32 %v217, 128
    %vm219 = vcmp.lt.s32.totalorder %v218, 196
    %v220 = vsel %vm219, %v215, %v9
    %s221 = scalar_lea.vmem [#allocation7], 104
    %223 = vst [vmem:[%s221] sm:$0xff] %v220
    %s224 = scalar_lea.vmem %s2, 112
    %v225 = vld [vmem:[%s224] sm:$0xff]
    %v226 = vlaneseq
    %v227 = vshrl.u32 %v226, 7
    %v228 = vadd.s32 %v227, 16
    %vm229 = vcmp.lt.s32.totalorder %v228, 36
    %v230 = vsel %vm229, %v225, %v9
    %v231 = vlaneseq
    %v232 = vand.u32 %v231, 127
    %vm234 = vcmp.lt.s32.totalorder %v232, 196
    %v235 = vsel %vm234, %v230, %v9
    %s236 = scalar_lea.vmem [#allocation7], 112
    %238 = vst [vmem:[%s236] sm:$0xff] %v235
    %s239 = scalar_lea.vmem %s2, 120
    %v240 = vld [vmem:[%s239] sm:$0xff]
    %v241 = vlaneseq
    %v242 = vshrl.u32 %v241, 7
    %v243 = vadd.s32 %v242, 16
    %vm244 = vcmp.lt.s32.totalorder %v243, 36
    %v245 = vsel %vm244, %v240, %v9
    %v246 = vlaneseq
    %v247 = vand.u32 %v246, 127
    %v248 = vadd.s32 %v247, 128
    %vm249 = vcmp.lt.s32.totalorder %v248, 196
    %v250 = vsel %vm249, %v245, %v9
    %s251 = scalar_lea.vmem [#allocation7], 120
    %253 = vst [vmem:[%s251] sm:$0xff] %v250
    %s254 = scalar_lea.vmem %s2, 128
    %v255 = vld [vmem:[%s254] sm:$0xff]
    %v256 = vlaneseq
    %v257 = vshrl.u32 %v256, 7
    %v258 = vadd.s32 %v257, 24
    %vm259 = vcmp.lt.s32.totalorder %v258, 36
    %v260 = vsel %vm259, %v255, %v9
    %v261 = vlaneseq
    %v262 = vand.u32 %v261, 127
    %vm264 = vcmp.lt.s32.totalorder %v262, 196
    %v265 = vsel %vm264, %v260, %v9
    %s266 = scalar_lea.vmem [#allocation7], 128
    %268 = vst [vmem:[%s266] sm:$0xff] %v265
    %s269 = scalar_lea.vmem %s2, 136
    %v270 = vld [vmem:[%s269] sm:$0xff]
    %v271 = vlaneseq
    %v272 = vshrl.u32 %v271, 7
    %v273 = vadd.s32 %v272, 24
    %vm274 = vcmp.lt.s32.totalorder %v273, 36
    %v275 = vsel %vm274, %v270, %v9
    %v276 = vlaneseq
    %v277 = vand.u32 %v276, 127
    %v278 = vadd.s32 %v277, 128
    %vm279 = vcmp.lt.s32.totalorder %v278, 196
    %v280 = vsel %vm279, %v275, %v9
    %s281 = scalar_lea.vmem [#allocation7], 136
    %283 = vst [vmem:[%s281] sm:$0xff] %v280
    %s284 = scalar_lea.vmem %s2, 144
    %v285 = vld [vmem:[%s284] sm:$0xff]
    %v286 = vlaneseq
    %v287 = vshrl.u32 %v286, 7
    %v288 = vadd.s32 %v287, 32
    %vm289 = vcmp.lt.s32.totalorder %v288, 36
    %v290 = vsel %vm289, %v285, %v9
    %v291 = vlaneseq
    %v292 = vand.u32 %v291, 127
    %vm294 = vcmp.lt.s32.totalorder %v292, 196
    %v295 = vsel %vm294, %v290, %v9
    %s296 = scalar_lea.vmem [#allocation7], 144
    %298 = vst [vmem:[%s296] sm:$0xff] %v295
    %s299 = scalar_lea.vmem %s2, 152
    %v300 = vld [vmem:[%s299] sm:$0xff]
    %v301 = vlaneseq
    %v302 = vshrl.u32 %v301, 7
    %v303 = vadd.s32 %v302, 32
    %vm304 = vcmp.lt.s32.totalorder %v303, 36
    %v305 = vsel %vm304, %v300, %v9
    %v306 = vlaneseq
    %v307 = vand.u32 %v306, 127
    %v308 = vadd.s32 %v307, 128
    %vm309 = vcmp.lt.s32.totalorder %v308, 196
    %v310 = vsel %vm309, %v305, %v9
    %s311 = scalar_lea.vmem [#allocation7], 152
    %313 = vst [vmem:[%s311] sm:$0xff] %v310
    %v314 = vld [vmem:[%s0] sm:$0xff]
    %v315 = vld [vmem:[%s1] sm:$0xff]
    %v316 = vld [vmem:[#allocation7] sm:$0xff]
    %v317 = vld [vmem:[#allocation7 + $0x8] sm:$0xff]
    %v318 = vld [vmem:[#allocation7 + $0x10] sm:$0xff]
    %v319 = vld [vmem:[#allocation7 + $0x18] sm:$0xff]
    %v320 = vld [vmem:[#allocation7 + $0x20] sm:$0xff]
    %v321 = vld [vmem:[#allocation7 + $0x28] sm:$0xff]
    %v322 = vld [vmem:[#allocation7 + $0x30] sm:$0xff]
    %v323 = vld [vmem:[#allocation7 + $0x38] sm:$0xff]
    %v324 = vld [vmem:[#allocation7 + $0x40] sm:$0xf]
    %v325 = vld [vmem:[#allocation7 + $0x48] sm:$0xf]
    %327 = vset.pattern.permute.xlu0 0
    %328 = vperm.xlu0 %327, %v315
    %v329 = vpop.permute.xlu0 %328
    %vm331 = vcmask 293888
    %v333 = vsel %vm331, %v314, 0
    %vm335 = vcmask 1043456
    %v337 = vsel %vm335, %v324, 0
    %v340 = vsel %vm335, %v325, 0
    %342 = vmatprep.subr.mxu0 %v317
    %343 = vmatpush1.msra.mxu0 %v316
    %344 = vmatprep.subr.mxu0 %v319
    %345 = vmatpush1.msra.mxu0 %v318
    %346 = vmatprep.subr.mxu0 %v321
    %347 = vmatpush1.msra.mxu0 %v320
    %348 = vmatprep.subr.mxu0 %v323
    %349 = vmatpush1.msra.mxu0 %v322
    %350 = vmatprep.subr.mxu0 %v340
    %351 = vmatpush1.msra.mxu0 %v337
    %352 = vmatprep.subr.mxu0 0.0
    %353 = vmatpush1.msra.mxu0 0.0
    %354 = vmatprep.subr.mxu0 0.0
    %355 = vmatpush1.msra.mxu0 0.0
    %356 = vmatprep.subr.mxu0 0.0
    %357 = vmatpush1.msra.mxu0 0.0
    %358 = vmatprep.subr.mxu0 0.0
    %359 = vmatpush1.msra.mxu0 0.0
    %360 = vmatprep.subr.mxu0 0.0
    %361 = vmatpush1.msra.mxu0 0.0
    %362 = vmatprep.subr.mxu0 0.0
    %363 = vmatpush1.msra.mxu0 0.0
    %364 = vmatprep.subr.mxu0 0.0
    %365 = vmatpush1.msra.mxu0 0.0
    %366 = vmatprep.subr.mxu0 0.0
    %367 = vmatpush1.msra.mxu0 0.0
    %368 = vmatprep.subr.mxu0 0.0
    %369 = vmatpush1.msra.mxu0 0.0
    %370 = vmatprep.subr.mxu0 0.0
    %371 = vmatpush1.msra.mxu0 0.0
    %372 = vmatprep.subr.mxu0 0.0
    %373 = vmatpush1.msra.mxu0 0.0
    %374 = vmatprep.subr.mxu0 0.0
    %375 = vmatpush1.msra.mxu0 0.0
    %376 = vmatprep.subr.mxu0 0.0
    %377 = vmatpush1.msra.mxu0 0.0
    %378 = vmatprep.subr.mxu0 0.0
    %379 = vmatpush1.msra.mxu0 0.0
    %380 = vmatprep.subr.mxu0 0.0
    %381 = vmatpush1.msra.mxu0 0.0
    %382 = vmatprep.subr.mxu0 0.0
    %383 = vmatpush1.msra.mxu0 0.0
    %384 = vmatprep.subr.mxu0 0.0
    %385 = vmatpush1.msra.mxu0 0.0
    %386 = vmatprep.subr.mxu0 0.0
    %387 = vmatpush1.msra.mxu0 0.0
    %388 = vmatprep.subr.mxu0 0.0
    %389 = vmatpush1.msra.mxu0 0.0
    %390 = vmatprep.subr.mxu0 0.0
    %391 = vmatpush1.msra.mxu0 0.0
    %392 = vmatprep.subr.mxu0 0.0
    %393 = vmatpush1.msra.mxu0 0.0
    %394 = vmatprep.subr.mxu0 0.0
    %395 = vmatpush1.msra.mxu0 0.0
    %396 = vmatprep.subr.mxu0 0.0
    %397 = vmatpush1.msra.mxu0 0.0
    %398 = vmatprep.subr.mxu0 0.0
    %399 = vmatpush1.msra.mxu0 0.0
    %400 = vmatprep.subr.mxu0 0.0
    %401 = vmatpush1.msra.mxu0 0.0
    %402 = vmatprep.subr.mxu0 0.0
    %403 = vmatpush1.msra.mxu0 0.0
    %404 = vmatprep.subr.mxu0 0.0
    %405 = vmatpush1.msra.mxu0 0.0
    %406 = vmatprep.mubr.f32.mxu0 0.0
    %407 = vmatmul.mubr.f32.gmra.mrb[0].mxu0 %v333
    %v408 = vpop.f32.mrb[0].mxu0
    %v409 = vadd.f32 %v329, %v408
    %v410 = vpop.f32.mrb[0].mxu0
    %v411 = vadd.f32 %v329, %v410
    %412 = vdwg.mxu0
    %v413 = vmax.f32 %v409, 0.0
    %v414 = vmax.f32 %v411, 0.0
    %415 = vst [vmem:[%s4] sm:$0xff] %v413
    %416 = vst [vmem:[%s4 + $0x8] sm:$0xff] %v414
    %s417 = scalar_lea.vmem [#allocation7], 80
    %v418 = vld [vmem:[%s417] sm:$0xff]
    %v419 = vld [vmem:[%s417 + $0x8] sm:$0xff]
    %v420 = vld [vmem:[%s417 + $0x10] sm:$0xff]
    %v421 = vld [vmem:[%s417 + $0x18] sm:$0xff]
    %v422 = vld [vmem:[%s417 + $0x20] sm:$0xff]
    %v423 = vld [vmem:[%s417 + $0x28] sm:$0xff]
    %v424 = vld [vmem:[%s417 + $0x30] sm:$0xff]
    %v425 = vld [vmem:[%s417 + $0x38] sm:$0xff]
    %v426 = vld [vmem:[%s417 + $0x40] sm:$0xf]
    %v427 = vld [vmem:[%s417 + $0x48] sm:$0xf]
    %v429 = vsel %vm335, %v426, 0
    %v432 = vsel %vm335, %v427, 0
    %434 = vmatprep.subr.mxu0 %v419
    %435 = vmatpush1.msra.mxu0 %v418
    %436 = vmatprep.subr.mxu0 %v421
    %437 = vmatpush1.msra.mxu0 %v420
    %438 = vmatprep.subr.mxu0 %v423
    %439 = vmatpush1.msra.mxu0 %v422
    %440 = vmatprep.subr.mxu0 %v425
    %441 = vmatpush1.msra.mxu0 %v424
    %442 = vmatprep.subr.mxu0 %v432
    %443 = vmatpush1.msra.mxu0 %v429
    %444 = vmatprep.subr.mxu0 0.0
    %445 = vmatpush1.msra.mxu0 0.0
    %446 = vmatprep.subr.mxu0 0.0
    %447 = vmatpush1.msra.mxu0 0.0
    %448 = vmatprep.subr.mxu0 0.0
    %449 = vmatpush1.msra.mxu0 0.0
    %450 = vmatprep.subr.mxu0 0.0
    %451 = vmatpush1.msra.mxu0 0.0
    %452 = vmatprep.subr.mxu0 0.0
    %453 = vmatpush1.msra.mxu0 0.0
    %454 = vmatprep.subr.mxu0 0.0
    %455 = vmatpush1.msra.mxu0 0.0
    %456 = vmatprep.subr.mxu0 0.0
    %457 = vmatpush1.msra.mxu0 0.0
    %458 = vmatprep.subr.mxu0 0.0
    %459 = vmatpush1.msra.mxu0 0.0
    %460 = vmatprep.subr.mxu0 0.0
    %461 = vmatpush1.msra.mxu0 0.0
    %462 = vmatprep.subr.mxu0 0.0
    %463 = vmatpush1.msra.mxu0 0.0
    %464 = vmatprep.subr.mxu0 0.0
    %465 = vmatpush1.msra.mxu0 0.0
    %466 = vmatprep.subr.mxu0 0.0
    %467 = vmatpush1.msra.mxu0 0.0
    %468 = vmatprep.subr.mxu0 0.0
    %469 = vmatpush1.msra.mxu0 0.0
    %470 = vmatprep.subr.mxu0 0.0
    %471 = vmatpush1.msra.mxu0 0.0
    %472 = vmatprep.subr.mxu0 0.0
    %473 = vmatpush1.msra.mxu0 0.0
    %474 = vmatprep.subr.mxu0 0.0
    %475 = vmatpush1.msra.mxu0 0.0
    %476 = vmatprep.subr.mxu0 0.0
    %477 = vmatpush1.msra.mxu0 0.0
    %478 = vmatprep.subr.mxu0 0.0
    %479 = vmatpush1.msra.mxu0 0.0
    %480 = vmatprep.subr.mxu0 0.0
    %481 = vmatpush1.msra.mxu0 0.0
    %482 = vmatprep.subr.mxu0 0.0
    %483 = vmatpush1.msra.mxu0 0.0
    %484 = vmatprep.subr.mxu0 0.0
    %485 = vmatpush1.msra.mxu0 0.0
    %486 = vmatprep.subr.mxu0 0.0
    %487 = vmatpush1.msra.mxu0 0.0
    %488 = vmatprep.subr.mxu0 0.0
    %489 = vmatpush1.msra.mxu0 0.0
    %490 = vmatprep.subr.mxu0 0.0
    %491 = vmatpush1.msra.mxu0 0.0
    %492 = vmatprep.subr.mxu0 0.0
    %493 = vmatpush1.msra.mxu0 0.0
    %494 = vmatprep.subr.mxu0 0.0
    %495 = vmatpush1.msra.mxu0 0.0
    %496 = vmatprep.subr.mxu0 0.0
    %497 = vmatpush1.msra.mxu0 0.0
    %498 = vmatprep.mubr.f32.mxu0 0.0
    %499 = vmatmul.mubr.f32.gmra.mrb[0].mxu0 %v333
    %v500 = vpop.f32.mrb[0].mxu0
    %v501 = vadd.f32 %v329, %v500
    %v502 = vpop.f32.mrb[0].mxu0
    %v503 = vadd.f32 %v329, %v502
    %504 = vdwg.mxu0
    %v505 = vmax.f32 %v501, 0.0
    %v506 = vmax.f32 %v503, 0.0
    %s507 = scalar_lea.vmem %s4, 16
    %508 = vst [vmem:[%s507] sm:$0xff] %v505
    %509 = vst [vmem:[%s507 + $0x8] sm:$0xff] %v506
    // Predicated region
    $region14: #{cnn3_relu_block.2} parent=1 // pred_check
      _
    $region15: #{cnn3_relu_block.2} parent=1 // pred_check_branch
      %511 = sbr.rel (0) target = $region17
    $region16: #{cnn3_relu_block.2} parent=1 // pred_region
      _
    $region17: #{cnn3_relu_block.2} parent=1 // pred_fallthru
      _
    // Predicated region
    $region18: #{cnn3_relu_block.2} parent=1 // pred_check
      _
    $region19: #{cnn3_relu_block.2} parent=1 // pred_check_branch
      %513 = sbr.rel (0) target = $region21
    $region20: #{cnn3_relu_block.2} parent=1 // pred_region
      _
    $region21: #{cnn3_relu_block.2} parent=1 // pred_fallthru
      _

</llo_original>
